<compile_context>
chip_gen: v6e
topology: v6e:2x2x1
jax: 0.10.0
libtpu: 0.0.40
codegen_flags: <defaults>
</compile_context>

<pallas_src>
import math
from functools import partial

import jax
import jax.numpy as jnp
from jax import lax
from jax.experimental import pallas as pl
from jax.experimental.pallas import tpu as pltpu


def _round_up(x, m):
    return (x + m - 1) // m * m


def _vmem_capacity_bytes():
    """Physical VMEM per TensorCore (64 MiB on v7x, 128 MiB on v5e/v6e)."""
    try:
        cap = getattr(pltpu.get_tpu_info(), "vmem_capacity_bytes", None)
        if cap:
            return int(cap)
    except Exception:
        pass
    return 64 * 1024 * 1024  # conservative fallback (v7x per-TC)


def _gelu_exact(x):
    # PyTorch F.gelu default (erf-based, exact).
    return 0.5 * x * (1.0 + lax.erf(x * (1.0 / math.sqrt(2.0))))


def _masked_layernorm(x, gamma, beta, n_valid, eps=1e-5):
    """nn.LayerNorm (biased variance) over the last dim where only the first
    `n_valid` columns carry real data; padded columns of x / gamma / beta are
    zero, so padded outputs stay exactly zero."""
    p = x.shape[-1]
    inv_n = 1.0 / float(n_valid)
    if n_valid == p:
        mean = jnp.mean(x, axis=-1, keepdims=True)
        centered = x - mean
        var = jnp.mean(centered * centered, axis=-1, keepdims=True)
    else:
        col = lax.broadcasted_iota(jnp.int32, x.shape, x.ndim - 1)
        valid = (col < n_valid).astype(x.dtype)
        mean = jnp.sum(x, axis=-1, keepdims=True) * inv_n
        centered = (x - mean) * valid
        var = jnp.sum(centered * centered, axis=-1, keepdims=True) * inv_n
    return (x - mean) * lax.rsqrt(var + eps) * gamma + beta


def mlp_kernel(x_ref, w1_ref, b1_ref, g1_ref, be1_ref,
               w2_ref, b2_ref, g2_ref, be2_ref, h2_ref, *, h_valid, e_valid):
    """Prologue: (TM, EP) f32 embedding-mean -> (TM, EP) bf16 hidden h2."""
    x = x_ref[...]
    h1 = jnp.dot(x, w1_ref[...], preferred_element_type=jnp.float32) + b1_ref[...]
    h1 = _gelu_exact(_masked_layernorm(h1, g1_ref[...], be1_ref[...], h_valid))
    h2 = jnp.dot(h1, w2_ref[...], preferred_element_type=jnp.float32) + b2_ref[...]
    h2 = _gelu_exact(_masked_layernorm(h2, g2_ref[...], be2_ref[...], e_valid))
    h2_ref[...] = h2.astype(h2_ref.dtype)


def logits_kernel(h2_ref, w3_ref, b3_ref, out_ref):
    """Hot loop: bf16 (TM, EP) @ bf16 (EP, TN) -> f32 accumulate -> logits."""
    out_ref[...] = (jnp.dot(h2_ref[...], w3_ref[...],
                            preferred_element_type=jnp.float32)
                    + b3_ref[...]).astype(out_ref.dtype)


def cbow_forward(context, params, *, tm_max=256, tn_max=2048,
                 logits_dtype=jnp.float32):
    """context: (B, C) int32 token ids.  Returns (B, vocab_size) logits."""
    emb_table = params["embedding"]                       # (V, E)
    E = emb_table.shape[1]
    H = params["w1"].shape[1]                             # E // 2
    V = params["w3"].shape[1]
    B = context.shape[0]

    # XLA glue: embedding gather + context mean -> (B, E) f32.
    x = jnp.take(emb_table, context, axis=0).mean(axis=1).astype(jnp.float32)

    # Lane-dense padded dims (multiples of 128 on lanes, 8 on sublanes).
    EP = _round_up(E, 128)
    HP = _round_up(H, 128)
    TM = min(tm_max, _round_up(B, 8))
    BP = _round_up(B, TM)

    vmem_cap = _vmem_capacity_bytes()
    vmem_limit = int(vmem_cap * 0.7)
    out_bytes = jnp.dtype(logits_dtype).itemsize

    # Biggest-streamed-tile-that-fits: pick TN (multiple of 128) so the
    # double-buffered working set stays inside a per-generation VMEM budget.
    budget = int(vmem_cap * 0.45)

    def _step_bytes(tn):
        return (2 * EP * tn * 2          # w3 tile (bf16), double-buffered
                + 2 * TM * EP * 2        # h2 tile (bf16), double-buffered
                + 2 * TM * tn * out_bytes  # out tile, double-buffered
                + 2 * tn * 4)            # b3 tile
    TN = _round_up(min(tn_max, _round_up(V, 128)), 128)
    while TN > 128 and _step_bytes(TN) > budget:
        TN -= 128
    VP = _round_up(V, TN)

    def pad2(a, rows, cols, dtype=None):
        a = jnp.pad(a, ((0, rows - a.shape[0]), (0, cols - a.shape[1])))
        return a if dtype is None else a.astype(dtype)

    x_p   = pad2(x, BP, EP)
    w1_p  = pad2(params["w1"], EP, HP)
    b1_p  = pad2(params["b1"], 1, HP)
    g1_p  = pad2(params["g1"], 1, HP)
    be1_p = pad2(params["be1"], 1, HP)
    w2_p  = pad2(params["w2"], HP, EP)
    b2_p  = pad2(params["b2"], 1, EP)
    g2_p  = pad2(params["g2"], 1, EP)
    be2_p = pad2(params["be2"], 1, EP)
    w3_p  = pad2(params["w3"], EP, VP, jnp.bfloat16)   # bf16 streaming weight
    b3_p  = pad2(params["b3"], 1, VP)

    # ---------------- Kernel A: MLP prologue (runs once over the batch) ------
    mlp = partial(mlp_kernel, h_valid=H, e_valid=E)
    mlp_cost = pl.CostEstimate(
        flops=2 * BP * EP * HP + 2 * BP * HP * EP,
        transcendentals=BP * (HP + EP),
        bytes_accessed=4 * (BP * EP + EP * HP + HP * EP + 4 * HP + 4 * EP)
                       + 2 * BP * EP)
    h2 = pl.pallas_call(
        mlp,
        out_shape=jax.ShapeDtypeStruct((BP, EP), jnp.bfloat16),
        grid_spec=pltpu.PrefetchScalarGridSpec(
            num_scalar_prefetch=0,
            grid=(BP // TM,),
            in_specs=[
                pl.BlockSpec((TM, EP), lambda i: (i, 0)),   # x batch tile
                pl.BlockSpec((EP, HP), lambda i: (0, 0)),   # w1
                pl.BlockSpec((1, HP),  lambda i: (0, 0)),   # b1
                pl.BlockSpec((1, HP),  lambda i: (0, 0)),   # g1
                pl.BlockSpec((1, HP),  lambda i: (0, 0)),   # be1
                pl.BlockSpec((HP, EP), lambda i: (0, 0)),   # w2
                pl.BlockSpec((1, EP),  lambda i: (0, 0)),   # b2
                pl.BlockSpec((1, EP),  lambda i: (0, 0)),   # g2
                pl.BlockSpec((1, EP),  lambda i: (0, 0)),   # be2
            ],
            out_specs=pl.BlockSpec((TM, EP), lambda i: (i, 0)),
        ),
        compiler_params=pltpu.CompilerParams(
            dimension_semantics=("parallel",),
            vmem_limit_bytes=vmem_limit,
        ),
        cost_estimate=mlp_cost,
    )(x_p, w1_p, b1_p, g1_p, be1_p, w2_p, b2_p, g2_p, be2_p)
    # TODO(synk): w1/w2/bias blocks have constant index_maps; pipeline_mode=
    # pl.Buffered(1) would halve their duplicate pipeline buffers at very
    # large E (this prologue runs once, so it is not on the hot path).

    # ---------------- Kernel B: streamed logits matmul ------------------------
    n_vocab_tiles = VP // TN
    n_batch_tiles = BP // TM
    logits_cost = pl.CostEstimate(
        flops=2 * BP * EP * VP,
        transcendentals=0,
        bytes_accessed=(2 * EP * VP                    # w3 read once (bf16)
                        + 2 * n_vocab_tiles * BP * EP  # h2 re-read per vocab tile
                        + 4 * VP                       # b3
                        + out_bytes * BP * VP))        # logits writeback
    out_p = pl.pallas_call(
        logits_kernel,
        out_shape=jax.ShapeDtypeStruct((BP, VP), logits_dtype),
        grid_spec=pltpu.PrefetchScalarGridSpec(
            num_scalar_prefetch=0,
            # Vocab axis OUTER: w3 block index constant across the inner batch
            # loop -> no re-DMA per batch tile; megacore shards vocab on v7x.
            grid=(n_vocab_tiles, n_batch_tiles),
            in_specs=[
                pl.BlockSpec((TM, EP), lambda j, i: (i, 0)),   # h2 (bf16)
                pl.BlockSpec((EP, TN), lambda j, i: (0, j)),   # w3 (bf16, streamed)
                pl.BlockSpec((1, TN),  lambda j, i: (0, j)),   # b3 vocab tile
            ],
            out_specs=pl.BlockSpec((TM, TN), lambda j, i: (i, j)),
        ),
        compiler_params=pltpu.CompilerParams(
            dimension_semantics=("parallel", "parallel"),
            vmem_limit_bytes=vmem_limit,
        ),
        cost_estimate=logits_cost,
    )(h2, w3_p, b3_p)

    return out_p[:B, :V]


def init_params(key, vocab_size, embedding_dim):
    """Deterministic init mirroring PyTorch defaults (shapes, not values)."""
    half = embedding_dim // 2
    ks = jax.random.split(key, 7)

    def linear(kw, kb, fan_in, fan_out):
        bound = 1.0 / math.sqrt(fan_in)
        w = jax.random.uniform(kw, (fan_in, fan_out), jnp.float32, -bound, bound)
        b = jax.random.uniform(kb, (1, fan_out), jnp.float32, -bound, bound)
        return w, b

    embedding = jax.random.normal(ks[0], (vocab_size, embedding_dim), jnp.float32)
    w1, b1 = linear(ks[1], ks[2], embedding_dim, half)
    w2, b2 = linear(ks[3], ks[4], half, embedding_dim)
    w3, b3 = linear(ks[5], ks[6], embedding_dim, vocab_size)
    return {
        "embedding": embedding,
        "w1": w1, "b1": b1,
        "g1": jnp.ones((1, half), jnp.float32), "be1": jnp.zeros((1, half), jnp.float32),
        "w2": w2, "b2": b2,
        "g2": jnp.ones((1, embedding_dim), jnp.float32),
        "be2": jnp.zeros((1, embedding_dim), jnp.float32),
        "w3": w3, "b3": b3,
    }


def cbow_reference(context, params):
    def ln(x, g, b, eps=1e-5):
        m = jnp.mean(x, axis=-1, keepdims=True)
        v = jnp.mean(jnp.square(x - m), axis=-1, keepdims=True)
        return (x - m) * lax.rsqrt(v + eps) * g + b

    x = jnp.take(params["embedding"], context, axis=0).mean(axis=1)
    h1 = _gelu_exact(ln(x @ params["w1"] + params["b1"], params["g1"], params["be1"]))
    h2 = _gelu_exact(ln(h1 @ params["w2"] + params["b2"], params["g2"], params["be2"]))
    return h2 @ params["w3"] + params["b3"]


if __name__ == "__main__":
    vocab_size, embedding_dim = 64, 32
    batch, context_len = 8, 4

    key = jax.random.PRNGKey(0)
    k_params, k_ctx = jax.random.split(key)
    params = init_params(k_params, vocab_size, embedding_dim)
    context = jax.random.randint(k_ctx, (batch, context_len), 0, vocab_size,
                                 dtype=jnp.int32)

    logits = jax.block_until_ready(cbow_forward(context, params))
    ref = cbow_reference(context, params)

    assert logits.shape == (batch, vocab_size)
    # bf16 streaming of w3/h2 (f32 accumulation) -> relaxed tolerance vs the
    # pure-f32 reference.
    assert jnp.allclose(logits, ref, atol=3e-2, rtol=3e-2), float(
        jnp.max(jnp.abs(logits - ref)))
    print("KERNEL_OK")
</pallas_src>

<mosaic_0001>
module attributes {stable_mosaic.version = 11 : i64} {
  func.func @mlp_kernel(%arg0: i32, %arg1: memref<8x128xf32, #tpu.memory_space<vmem>>, %arg2: memref<128x128xf32, #tpu.memory_space<vmem>>, %arg3: memref<1x128xf32, #tpu.memory_space<vmem>>, %arg4: memref<1x128xf32, #tpu.memory_space<vmem>>, %arg5: memref<1x128xf32, #tpu.memory_space<vmem>>, %arg6: memref<128x128xf32, #tpu.memory_space<vmem>>, %arg7: memref<1x128xf32, #tpu.memory_space<vmem>>, %arg8: memref<1x128xf32, #tpu.memory_space<vmem>>, %arg9: memref<1x128xf32, #tpu.memory_space<vmem>>, %arg10: memref<8x128xbf16, #tpu.memory_space<vmem>>) attributes {dimension_semantics = [#tpu.dimension_semantics<parallel>], iteration_bounds = array<i64: 1>, scalar_prefetch = 0 : i64, scratch_operands = 0 : i64, tpu.core_type = #tpu.core_type<tc>, window_params = [{transform_indices = @transform_0, window_bounds = array<i64: 8, 128>}, {pipeline_mode = #tpu.pipeline_mode<synchronous>, transform_indices = @transform_1, window_bounds = array<i64: 128, 128>}, {pipeline_mode = #tpu.pipeline_mode<synchronous>, transform_indices = @transform_2, window_bounds = array<i64: 1, 128>}, {pipeline_mode = #tpu.pipeline_mode<synchronous>, transform_indices = @transform_3, window_bounds = array<i64: 1, 128>}, {pipeline_mode = #tpu.pipeline_mode<synchronous>, transform_indices = @transform_4, window_bounds = array<i64: 1, 128>}, {pipeline_mode = #tpu.pipeline_mode<synchronous>, transform_indices = @transform_5, window_bounds = array<i64: 128, 128>}, {pipeline_mode = #tpu.pipeline_mode<synchronous>, transform_indices = @transform_6, window_bounds = array<i64: 1, 128>}, {pipeline_mode = #tpu.pipeline_mode<synchronous>, transform_indices = @transform_7, window_bounds = array<i64: 1, 128>}, {pipeline_mode = #tpu.pipeline_mode<synchronous>, transform_indices = @transform_8, window_bounds = array<i64: 1, 128>}, {transform_indices = @transform_9, window_bounds = array<i64: 8, 128>}]} {
    %c0 = arith.constant 0 : index
    %c0_0 = arith.constant 0 : index
    %0 = vector.load %arg1[%c0, %c0_0] : memref<8x128xf32, #tpu.memory_space<vmem>>, vector<8x128xf32>
    %c0_1 = arith.constant 0 : index
    %c0_2 = arith.constant 0 : index
    %1 = vector.load %arg2[%c0_1, %c0_2] : memref<128x128xf32, #tpu.memory_space<vmem>>, vector<128x128xf32>
    %cst = arith.constant dense<0.000000e+00> : vector<8x128xf32>
    %2 = tpu.matmul %0, %1, %cst {dimension_numbers = #tpu.dot_dimension_numbers<[1], [0], [0], [1], [0, 0, 1, 1], [], []>} : vector<8x128xf32>, vector<128x128xf32>, vector<8x128xf32> -> vector<8x128xf32>
    %c0_3 = arith.constant 0 : index
    %c0_4 = arith.constant 0 : index
    %3 = vector.load %arg3[%c0_3, %c0_4] : memref<1x128xf32, #tpu.memory_space<vmem>>, vector<1x128xf32>
    %4 = vector.broadcast %3 : vector<1x128xf32> to vector<8x128xf32>
    %5 = arith.addf %2, %4 : vector<8x128xf32>
    %c0_5 = arith.constant 0 : index
    %c0_6 = arith.constant 0 : index
    %6 = vector.load %arg4[%c0_5, %c0_6] : memref<1x128xf32, #tpu.memory_space<vmem>>, vector<1x128xf32>
    %c0_7 = arith.constant 0 : index
    %c0_8 = arith.constant 0 : index
    %7 = vector.load %arg5[%c0_7, %c0_8] : memref<1x128xf32, #tpu.memory_space<vmem>>, vector<1x128xf32>
    %8 = tpu.iota {dimensions = array<i32: 1>} : vector<8x128xi32>
    %c16_i32 = arith.constant 16 : i32
    %9 = vector.broadcast %c16_i32 : i32 to vector<8x128xi32>
    %10 = arith.cmpi slt, %8, %9 : vector<8x128xi32>
    %11 = arith.extui %10 : vector<8x128xi1> to vector<8x128xi32>
    %12 = arith.sitofp %11 : vector<8x128xi32> to vector<8x128xf32>
    %cst_9 = arith.constant dense<0.000000e+00> : vector<8xf32>
    %13 = vector.multi_reduction <add>, %5, %cst_9 [1] : vector<8x128xf32> to vector<8xf32>
    %14 = vector.shape_cast %13 : vector<8xf32> to vector<8x1xf32>
    %cst_10 = arith.constant 6.250000e-02 : f32
    %15 = vector.broadcast %cst_10 : f32 to vector<8x1xf32>
    %16 = arith.mulf %14, %15 : vector<8x1xf32>
    %17 = vector.broadcast %16 : vector<8x1xf32> to vector<8x128xf32>
    %18 = arith.subf %5, %17 : vector<8x128xf32>
    %19 = arith.mulf %18, %12 : vector<8x128xf32>
    %20 = arith.mulf %19, %19 : vector<8x128xf32>
    %cst_11 = arith.constant dense<0.000000e+00> : vector<8xf32>
    %21 = vector.multi_reduction <add>, %20, %cst_11 [1] : vector<8x128xf32> to vector<8xf32>
    %22 = vector.shape_cast %21 : vector<8xf32> to vector<8x1xf32>
    %cst_12 = arith.constant 6.250000e-02 : f32
    %23 = vector.broadcast %cst_12 : f32 to vector<8x1xf32>
    %24 = arith.mulf %22, %23 : vector<8x1xf32>
    %25 = vector.broadcast %16 : vector<8x1xf32> to vector<8x128xf32>
    %26 = arith.subf %5, %25 : vector<8x128xf32>
    %cst_13 = arith.constant 9.99999974E-6 : f32
    %27 = vector.broadcast %cst_13 : f32 to vector<8x1xf32>
    %28 = arith.addf %24, %27 : vector<8x1xf32>
    %29 = math.rsqrt %28 : vector<8x1xf32>
    %30 = vector.broadcast %29 : vector<8x1xf32> to vector<8x128xf32>
    %31 = arith.mulf %26, %30 : vector<8x128xf32>
    %32 = vector.broadcast %6 : vector<1x128xf32> to vector<8x128xf32>
    %33 = arith.mulf %31, %32 : vector<8x128xf32>
    %34 = vector.broadcast %7 : vector<1x128xf32> to vector<8x128xf32>
    %35 = arith.addf %33, %34 : vector<8x128xf32>
    %cst_14 = arith.constant 5.000000e-01 : f32
    %36 = vector.broadcast %cst_14 : f32 to vector<8x128xf32>
    %37 = arith.mulf %36, %35 : vector<8x128xf32>
    %cst_15 = arith.constant 0.707106769 : f32
    %38 = vector.broadcast %cst_15 : f32 to vector<8x128xf32>
    %39 = arith.mulf %35, %38 : vector<8x128xf32>
    %40 = math.erf %39 : vector<8x128xf32>
    %cst_16 = arith.constant 1.000000e+00 : f32
    %41 = vector.broadcast %cst_16 : f32 to vector<8x128xf32>
    %42 = arith.addf %41, %40 : vector<8x128xf32>
    %43 = arith.mulf %37, %42 : vector<8x128xf32>
    %c0_17 = arith.constant 0 : index
    %c0_18 = arith.constant 0 : index
    %44 = vector.load %arg6[%c0_17, %c0_18] : memref<128x128xf32, #tpu.memory_space<vmem>>, vector<128x128xf32>
    %cst_19 = arith.constant dense<0.000000e+00> : vector<8x128xf32>
    %45 = tpu.matmul %43, %44, %cst_19 {dimension_numbers = #tpu.dot_dimension_numbers<[1], [0], [0], [1], [0, 0, 1, 1], [], []>} : vector<8x128xf32>, vector<128x128xf32>, vector<8x128xf32> -> vector<8x128xf32>
    %c0_20 = arith.constant 0 : index
    %c0_21 = arith.constant 0 : index
    %46 = vector.load %arg7[%c0_20, %c0_21] : memref<1x128xf32, #tpu.memory_space<vmem>>, vector<1x128xf32>
    %47 = vector.broadcast %46 : vector<1x128xf32> to vector<8x128xf32>
    %48 = arith.addf %45, %47 : vector<8x128xf32>
    %c0_22 = arith.constant 0 : index
    %c0_23 = arith.constant 0 : index
    %49 = vector.load %arg8[%c0_22, %c0_23] : memref<1x128xf32, #tpu.memory_space<vmem>>, vector<1x128xf32>
    %c0_24 = arith.constant 0 : index
    %c0_25 = arith.constant 0 : index
    %50 = vector.load %arg9[%c0_24, %c0_25] : memref<1x128xf32, #tpu.memory_space<vmem>>, vector<1x128xf32>
    %51 = tpu.iota {dimensions = array<i32: 1>} : vector<8x128xi32>
    %c32_i32 = arith.constant 32 : i32
    %52 = vector.broadcast %c32_i32 : i32 to vector<8x128xi32>
    %53 = arith.cmpi slt, %51, %52 : vector<8x128xi32>
    %54 = arith.extui %53 : vector<8x128xi1> to vector<8x128xi32>
    %55 = arith.sitofp %54 : vector<8x128xi32> to vector<8x128xf32>
    %cst_26 = arith.constant dense<0.000000e+00> : vector<8xf32>
    %56 = vector.multi_reduction <add>, %48, %cst_26 [1] : vector<8x128xf32> to vector<8xf32>
    %57 = vector.shape_cast %56 : vector<8xf32> to vector<8x1xf32>
    %cst_27 = arith.constant 3.125000e-02 : f32
    %58 = vector.broadcast %cst_27 : f32 to vector<8x1xf32>
    %59 = arith.mulf %57, %58 : vector<8x1xf32>
    %60 = vector.broadcast %59 : vector<8x1xf32> to vector<8x128xf32>
    %61 = arith.subf %48, %60 : vector<8x128xf32>
    %62 = arith.mulf %61, %55 : vector<8x128xf32>
    %63 = arith.mulf %62, %62 : vector<8x128xf32>
    %cst_28 = arith.constant dense<0.000000e+00> : vector<8xf32>
    %64 = vector.multi_reduction <add>, %63, %cst_28 [1] : vector<8x128xf32> to vector<8xf32>
    %65 = vector.shape_cast %64 : vector<8xf32> to vector<8x1xf32>
    %cst_29 = arith.constant 3.125000e-02 : f32
    %66 = vector.broadcast %cst_29 : f32 to vector<8x1xf32>
    %67 = arith.mulf %65, %66 : vector<8x1xf32>
    %68 = vector.broadcast %59 : vector<8x1xf32> to vector<8x128xf32>
    %69 = arith.subf %48, %68 : vector<8x128xf32>
    %cst_30 = arith.constant 9.99999974E-6 : f32
    %70 = vector.broadcast %cst_30 : f32 to vector<8x1xf32>
    %71 = arith.addf %67, %70 : vector<8x1xf32>
    %72 = math.rsqrt %71 : vector<8x1xf32>
    %73 = vector.broadcast %72 : vector<8x1xf32> to vector<8x128xf32>
    %74 = arith.mulf %69, %73 : vector<8x128xf32>
    %75 = vector.broadcast %49 : vector<1x128xf32> to vector<8x128xf32>
    %76 = arith.mulf %74, %75 : vector<8x128xf32>
    %77 = vector.broadcast %50 : vector<1x128xf32> to vector<8x128xf32>
    %78 = arith.addf %76, %77 : vector<8x128xf32>
    %cst_31 = arith.constant 5.000000e-01 : f32
    %79 = vector.broadcast %cst_31 : f32 to vector<8x128xf32>
    %80 = arith.mulf %79, %78 : vector<8x128xf32>
    %cst_32 = arith.constant 0.707106769 : f32
    %81 = vector.broadcast %cst_32 : f32 to vector<8x128xf32>
    %82 = arith.mulf %78, %81 : vector<8x128xf32>
    %83 = math.erf %82 : vector<8x128xf32>
    %cst_33 = arith.constant 1.000000e+00 : f32
    %84 = vector.broadcast %cst_33 : f32 to vector<8x128xf32>
    %85 = arith.addf %84, %83 : vector<8x128xf32>
    %86 = arith.mulf %80, %85 : vector<8x128xf32>
    %87 = arith.truncf %86 : vector<8x128xf32> to vector<8x128xbf16>
    %c0_34 = arith.constant 0 : index
    %c0_35 = arith.constant 0 : index
    %88 = vector.load %arg10[%c0_34, %c0_35] : memref<8x128xbf16, #tpu.memory_space<vmem>>, vector<8x128xbf16>
    tpu.vector_store %arg10[%c0_34, %c0_35], %87 {strides = array<i32>} : memref<8x128xbf16, #tpu.memory_space<vmem>>, vector<8x128xbf16>,
    return
  }
  func.func @transform_0(%arg0: i32) -> (i32, i32) {
    %c0_i32 = arith.constant 0 : i32
    %c0_i32_0 = arith.constant 0 : i32
    return %arg0, %c0_i32 : i32, i32
  }
  func.func @transform_1(%arg0: i32) -> (i32, i32) {
    %c0_i32 = arith.constant 0 : i32
    %c0_i32_0 = arith.constant 0 : i32
    %c0_i32_1 = arith.constant 0 : i32
    return %c0_i32, %c0_i32_0 : i32, i32
  }
  func.func @transform_2(%arg0: i32) -> (i32, i32) {
    %c0_i32 = arith.constant 0 : i32
    %c0_i32_0 = arith.constant 0 : i32
    %c0_i32_1 = arith.constant 0 : i32
    return %c0_i32, %c0_i32_0 : i32, i32
  }
  func.func @transform_3(%arg0: i32) -> (i32, i32) {
    %c0_i32 = arith.constant 0 : i32
    %c0_i32_0 = arith.constant 0 : i32
    %c0_i32_1 = arith.constant 0 : i32
    return %c0_i32, %c0_i32_0 : i32, i32
  }
  func.func @transform_4(%arg0: i32) -> (i32, i32) {
    %c0_i32 = arith.constant 0 : i32
    %c0_i32_0 = arith.constant 0 : i32
    %c0_i32_1 = arith.constant 0 : i32
    return %c0_i32, %c0_i32_0 : i32, i32
  }
  func.func @transform_5(%arg0: i32) -> (i32, i32) {
    %c0_i32 = arith.constant 0 : i32
    %c0_i32_0 = arith.constant 0 : i32
    %c0_i32_1 = arith.constant 0 : i32
    return %c0_i32, %c0_i32_0 : i32, i32
  }
  func.func @transform_6(%arg0: i32) -> (i32, i32) {
    %c0_i32 = arith.constant 0 : i32
    %c0_i32_0 = arith.constant 0 : i32
    %c0_i32_1 = arith.constant 0 : i32
    return %c0_i32, %c0_i32_0 : i32, i32
  }
  func.func @transform_7(%arg0: i32) -> (i32, i32) {
    %c0_i32 = arith.constant 0 : i32
    %c0_i32_0 = arith.constant 0 : i32
    %c0_i32_1 = arith.constant 0 : i32
    return %c0_i32, %c0_i32_0 : i32, i32
  }
  func.func @transform_8(%arg0: i32) -> (i32, i32) {
    %c0_i32 = arith.constant 0 : i32
    %c0_i32_0 = arith.constant 0 : i32
    %c0_i32_1 = arith.constant 0 : i32
    return %c0_i32, %c0_i32_0 : i32, i32
  }
  func.func @transform_9(%arg0: i32) -> (i32, i32) {
    %c0_i32 = arith.constant 0 : i32
    %c0_i32_0 = arith.constant 0 : i32
    return %arg0, %c0_i32 : i32, i32
  }
}

</mosaic_0001>

<llo_original>
// kernel: tpu_custom_call.1
$region0: #{tpu_custom_call.1}
  #allocation0 [shape = 'u32[]', space=smem, size = 0x4, offset = 0x4, fixed_abs, tag = 'smem constant byte address 0x4 - core index']
  #allocation1 [shape = 'u32[144,128]{1,0:T(1,128)}', space=vmem, size = 0x12000, scoped, tag = 'internal scratch']
  %s0 = inlined_call_operand.hbm [shape: f32[8,128], index: 0, kind: input, shape index: {}]
  %s1 = inlined_call_operand.hbm [shape: f32[128,128], index: 1, kind: input, shape index: {}]
  %s2 = inlined_call_operand.vmem [shape: f32[1,128], index: 2, kind: input, shape index: {}]
  %s3 = inlined_call_operand.vmem [shape: f32[1,128], index: 3, kind: input, shape index: {}]
  %s4 = inlined_call_operand.vmem [shape: f32[1,128], index: 4, kind: input, shape index: {}]
  %s5 = inlined_call_operand.hbm [shape: f32[128,128], index: 5, kind: input, shape index: {}]
  %s6 = inlined_call_operand.vmem [shape: f32[1,128], index: 6, kind: input, shape index: {}]
  %s7 = inlined_call_operand.vmem [shape: f32[1,128], index: 7, kind: input, shape index: {}]
  %s8 = inlined_call_operand.vmem [shape: f32[1,128], index: 8, kind: input, shape index: {}]
  %s9 = inlined_call_operand.hbm [shape: bf16[8,128], index: 9, kind: output, shape index: {}]
  %s10 = sld [smem:[#allocation0]]
  $region58: #{tpu_custom_call.1} parent=0
    _
  %s12 = ssub.s32 1, %s10
  %s13 = scalar_select 0, %s12, %s10
  $region1: #{tpu_custom_call.1} parent=0
    #allocation2 [shape = 'u8[4096]{0}', space=vmem, size = 0x1000, scoped, tag = 'input window, operand 0, single buffered']
    #allocation3 [shape = 's32[1]{0}', space=sflag, size = 0x4, scoped, tag = 'scoped memory for tpu_custom_call.1']
    #allocation4 [shape = 's32[1]{0}', space=sflag, size = 0x4, scoped, tag = 'scoped memory for tpu_custom_call.1']
    #allocation5 [shape = 'u8[65536]{0}', space=vmem, size = 0x10000, scoped, tag = 'input window, operand 1, single buffered']
    #allocation6 [shape = 's32[1]{0}', space=sflag, size = 0x4, scoped, tag = 'scoped memory for tpu_custom_call.1']
    #allocation7 [shape = 'u8[65536]{0}', space=vmem, size = 0x10000, scoped, tag = 'input window, operand 5, single buffered']
    #allocation8 [shape = 'u8[2048]{0}', space=vmem, size = 0x800, scoped, tag = 'output window, operand 0, single buffered']
    %14 = vsyncpa [#allocation3], 0
    %15 = vsyncpa [#allocation6], 0
    %16 = vsyncpa [#allocation4], 0
    // Predicated region
    $region2: #{tpu_custom_call.1} parent=1 // pred_check
      _
    $region3: #{tpu_custom_call.1} parent=1 // pred_check_branch
      %18 = sbr.rel (0) target = $region5
    $region4: #{tpu_custom_call.1} parent=1 // pred_region
      %s20 = ssub.s32 128, 128
      %21 = vsyncadd [#allocation3], %s20
      %s23 = sshll.u32 [#allocation2], 4
      %s24 = int_to_ptr.vmem [resolvable:$true] %s23
      %26 = dma.hbm_to_vmem [thread:$0]  %s0, 128, %s24, [#allocation3]
    $region5: #{tpu_custom_call.1} parent=1 // pred_fallthru
      _
    // Predicated region
    $region6: #{tpu_custom_call.1} parent=1 // pred_check
      _
    $region7: #{tpu_custom_call.1} parent=1 // pred_check_branch
      %28 = sbr.rel (0) target = $region9
    $region8: #{tpu_custom_call.1} parent=1 // pred_region
      %s30 = ssub.s32 2048, 2048
      %31 = vsyncadd [#allocation6], %s30
      %s32 = sshll.u32 [#allocation5], 4
      %s33 = int_to_ptr.vmem [resolvable:$true] %s32
      %38 = dma.hbm_to_vmem [thread:$0]  %s1, 2048, %s33, [#allocation6], 128, 128, 8
    $region9: #{tpu_custom_call.1} parent=1 // pred_fallthru
      _
    // Predicated region
    $region10: #{tpu_custom_call.1} parent=1 // pred_check
      _
    $region11: #{tpu_custom_call.1} parent=1 // pred_check_branch
      %40 = sbr.rel (0) target = $region13
    $region12: #{tpu_custom_call.1} parent=1 // pred_region
      _
    $region13: #{tpu_custom_call.1} parent=1 // pred_fallthru
      _
    // Predicated region
    $region14: #{tpu_custom_call.1} parent=1 // pred_check
      _
    $region15: #{tpu_custom_call.1} parent=1 // pred_check_branch
      %42 = sbr.rel (0) target = $region17
    $region16: #{tpu_custom_call.1} parent=1 // pred_region
      _
    $region17: #{tpu_custom_call.1} parent=1 // pred_fallthru
      _
    // Predicated region
    $region18: #{tpu_custom_call.1} parent=1 // pred_check
      _
    $region19: #{tpu_custom_call.1} parent=1 // pred_check_branch
      %44 = sbr.rel (0) target = $region21
    $region20: #{tpu_custom_call.1} parent=1 // pred_region
      _
    $region21: #{tpu_custom_call.1} parent=1 // pred_fallthru
      _
    // Predicated region
    $region22: #{tpu_custom_call.1} parent=1 // pred_check
      _
    $region23: #{tpu_custom_call.1} parent=1 // pred_check_branch
      %46 = sbr.rel (0) target = $region25
    $region24: #{tpu_custom_call.1} parent=1 // pred_region
      %s48 = ssub.s32 2048, 2048
      %49 = vsyncadd [#allocation6], %s48
      %s50 = sshll.u32 [#allocation7], 4
      %s51 = int_to_ptr.vmem [resolvable:$true] %s50
      %56 = dma.hbm_to_vmem [thread:$0]  %s5, 2048, %s51, [#allocation6], 128, 128, 8
    $region25: #{tpu_custom_call.1} parent=1 // pred_fallthru
      _
    // Predicated region
    $region26: #{tpu_custom_call.1} parent=1 // pred_check
      _
    $region27: #{tpu_custom_call.1} parent=1 // pred_check_branch
      %58 = sbr.rel (0) target = $region29
    $region28: #{tpu_custom_call.1} parent=1 // pred_region
      _
    $region29: #{tpu_custom_call.1} parent=1 // pred_fallthru
      _
    // Predicated region
    $region30: #{tpu_custom_call.1} parent=1 // pred_check
      _
    $region31: #{tpu_custom_call.1} parent=1 // pred_check_branch
      %60 = sbr.rel (0) target = $region33
    $region32: #{tpu_custom_call.1} parent=1 // pred_region
      _
    $region33: #{tpu_custom_call.1} parent=1 // pred_fallthru
      _
    // Predicated region
    $region34: #{tpu_custom_call.1} parent=1 // pred_check
      _
    $region35: #{tpu_custom_call.1} parent=1 // pred_check_branch
      %62 = sbr.rel (0) target = $region37
    $region36: #{tpu_custom_call.1} parent=1 // pred_region
      _
    $region37: #{tpu_custom_call.1} parent=1 // pred_fallthru
      _
    // Predicated region
    $region38: #{tpu_custom_call.1} parent=1 // pred_check
      _
    $region39: #{tpu_custom_call.1} parent=1 // pred_check_branch
      %64 = sbr.rel (0) target = $region41
    $region40: #{tpu_custom_call.1} parent=1 // pred_region
      %65 = dma.done [#allocation3], 128
    $region41: #{tpu_custom_call.1} parent=1 // pred_fallthru
      _
    // Predicated region
    $region42: #{tpu_custom_call.1} parent=1 // pred_check
      _
    $region43: #{tpu_custom_call.1} parent=1 // pred_check_branch
      %67 = sbr.rel (0) target = $region45
    $region44: #{tpu_custom_call.1} parent=1 // pred_region
      %68 = dma.done [#allocation6], 2048
    $region45: #{tpu_custom_call.1} parent=1 // pred_fallthru
      _
    // Predicated region
    $region46: #{tpu_custom_call.1} parent=1 // pred_check
      _
    $region47: #{tpu_custom_call.1} parent=1 // pred_check_branch
      %70 = sbr.rel (0) target = $region49
    $region48: #{tpu_custom_call.1} parent=1 // pred_region
      %71 = dma.done [#allocation6], 2048
    $region49: #{tpu_custom_call.1} parent=1 // pred_fallthru
      _
    %v72 = vld [vmem:[#allocation2] sm:$0xff]
    %v73 = vld [vmem:[#allocation5] sm:$0xff]
    %v74 = vld [vmem:[#allocation5 + $0x8] sm:$0xff]
    %v75 = vld [vmem:[#allocation5 + $0x10] sm:$0xff]
    %v76 = vld [vmem:[#allocation5 + $0x18] sm:$0xff]
    %v77 = vld [vmem:[#allocation5 + $0x20] sm:$0xff]
    %v78 = vld [vmem:[#allocation5 + $0x28] sm:$0xff]
    %v79 = vld [vmem:[#allocation5 + $0x30] sm:$0xff]
    %v80 = vld [vmem:[#allocation5 + $0x38] sm:$0xff]
    %v81 = vld [vmem:[#allocation5 + $0x40] sm:$0xff]
    %v82 = vld [vmem:[#allocation5 + $0x48] sm:$0xff]
    %v83 = vld [vmem:[#allocation5 + $0x50] sm:$0xff]
    %v84 = vld [vmem:[#allocation5 + $0x58] sm:$0xff]
    %v85 = vld [vmem:[#allocation5 + $0x60] sm:$0xff]
    %v86 = vld [vmem:[#allocation5 + $0x68] sm:$0xff]
    %v87 = vld [vmem:[#allocation5 + $0x70] sm:$0xff]
    %v88 = vld [vmem:[#allocation5 + $0x78] sm:$0xff]
    %v89 = vld [vmem:[%s2] sm:$0x1]
    %v91 = vlaneseq
    %v92 = vshrl.u32 %v91, 7
    %v93 = vsub.s32 0, %v92
    %v94 = vrot.slane %v89, %v93
    %96 = vmatprep.subr.mxu0 0.0
    %97 = vmatpush1.msra.mxu0 %v88
    %98 = vmatprep.subr.mxu0 0.0
    %99 = vmatpush1.msra.mxu0 %v87
    %100 = vmatprep.subr.mxu0 0.0
    %101 = vmatpush1.msra.mxu0 %v86
    %102 = vmatprep.subr.mxu0 0.0
    %103 = vmatpush1.msra.mxu0 %v85
    %104 = vmatprep.subr.mxu0 0.0
    %105 = vmatpush1.msra.mxu0 %v84
    %106 = vmatprep.subr.mxu0 0.0
    %107 = vmatpush1.msra.mxu0 %v83
    %108 = vmatprep.subr.mxu0 0.0
    %109 = vmatpush1.msra.mxu0 %v82
    %110 = vmatprep.subr.mxu0 0.0
    %111 = vmatpush1.msra.mxu0 %v81
    %112 = vmatprep.subr.mxu0 0.0
    %113 = vmatpush1.msra.mxu0 %v80
    %114 = vmatprep.subr.mxu0 0.0
    %115 = vmatpush1.msra.mxu0 %v79
    %116 = vmatprep.subr.mxu0 0.0
    %117 = vmatpush1.msra.mxu0 %v78
    %118 = vmatprep.subr.mxu0 0.0
    %119 = vmatpush1.msra.mxu0 %v77
    %120 = vmatprep.subr.mxu0 0.0
    %121 = vmatpush1.msra.mxu0 %v76
    %122 = vmatprep.subr.mxu0 0.0
    %123 = vmatpush1.msra.mxu0 %v75
    %124 = vmatprep.subr.mxu0 0.0
    %125 = vmatpush1.msra.mxu0 %v74
    %126 = vmatprep.subr.mxu0 0.0
    %127 = vmatpush1.msra.mxu0 %v73
    %128 = vmatprep.subr.mxu0 0.0
    %129 = vmatpush2.msra.mxu0 0.0
    %130 = vmatprep.subr.mxu0 0.0
    %131 = vmatpush2.msra.mxu0 0.0
    %132 = vmatprep.subr.mxu0 0.0
    %133 = vmatpush2.msra.mxu0 0.0
    %134 = vmatprep.subr.mxu0 0.0
    %135 = vmatpush2.msra.mxu0 0.0
    %136 = vmatprep.subr.mxu0 0.0
    %137 = vmatpush2.msra.mxu0 0.0
    %138 = vmatprep.subr.mxu0 0.0
    %139 = vmatpush2.msra.mxu0 0.0
    %140 = vmatprep.subr.mxu0 0.0
    %141 = vmatpush2.msra.mxu0 0.0
    %142 = vmatprep.subr.mxu0 0.0
    %143 = vmatpush2.msra.mxu0 0.0
    %144 = vmatprep.subr.mxu0 0.0
    %145 = vmatpush2.msra.mxu0 0.0
    %146 = vmatprep.subr.mxu0 0.0
    %147 = vmatpush2.msra.mxu0 0.0
    %148 = vmatprep.subr.mxu0 0.0
    %149 = vmatpush2.msra.mxu0 0.0
    %150 = vmatprep.subr.mxu0 0.0
    %151 = vmatpush2.msra.mxu0 0.0
    %152 = vmatprep.subr.mxu0 0.0
    %153 = vmatpush2.msra.mxu0 0.0
    %154 = vmatprep.subr.mxu0 0.0
    %155 = vmatpush2.msra.mxu0 0.0
    %156 = vmatprep.subr.mxu0 0.0
    %157 = vmatpush2.msra.mxu0 0.0
    %158 = vmatprep.subr.mxu0 0.0
    %159 = vmatpush2.msra.mxu0 0.0
    %160 = vmatprep.mubr.f32.mxu0 0.0
    %161 = vmatmul.mubr.f32.gmra.mxu0 %v72
    %v162 = vpop.f32.mrf.mxu0
    %v163 = vadd.f32 %v94, %v162
    %v164 = vpop.f32.mrf.mxu0
    %165 = vdwg.mxu0
    %v166 = vld [vmem:[%s3] sm:$0x1]
    %v167 = vld [vmem:[%s4] sm:$0x1]
    %v168 = vlaneseq
    %v169 = vand.u32 %v168, 127
    %vm170 = vcmp.lt.s32.totalorder %v169, 16
    %v171 = vsel %vm170, 1, 0
    %v172 = vcvt.s32.f32 %v171
    %173 = vadd.xlane.f32.xlu0 %v163
    %v174 = vpop.xlane.xlu0 %173
    %v175 = vmul.f32 %v174, 0.0625
    %v176 = vsub.f32 %v163, %v175
    %v177 = vmul.f32 %v176, %v172
    %v178 = vmul.f32 %v177, %v177
    %179 = vadd.xlane.f32.xlu0 %v178
    %v180 = vpop.xlane.xlu0 %179
    %v181 = vmul.f32 %v180, 0.0625
    %v182 = vadd.f32 %v181, 1e-05
    %v183 = vrsqrt.pop %v182
    %v184 = vmul.f32 %v176, %v183
    %v186 = vlaneseq
    %v187 = vshrl.u32 %v186, 7
    %v188 = vsub.s32 0, %v187
    %v189 = vrot.slane %v166, %v188
    %v191 = vmul.f32 %v184, %v189
    %v193 = vlaneseq
    %v194 = vshrl.u32 %v193, 7
    %v195 = vsub.s32 0, %v194
    %v196 = vrot.slane %v167, %v195
    %v198 = vadd.f32 %v191, %v196
    %v199 = vmul.f32 %v198, 0.5
    %v200 = vmul.f32 %v198, 0.70710677
    %v201 = verf.f32.pop %v200
    %v202 = vadd.f32 %v201, 1.0
    %v203 = vmul.f32 %v199, %v202
    %v204 = vld [vmem:[#allocation7] sm:$0xff]
    %v205 = vld [vmem:[#allocation7 + $0x8] sm:$0xff]
    %v206 = vld [vmem:[#allocation7 + $0x10] sm:$0xff]
    %v207 = vld [vmem:[#allocation7 + $0x18] sm:$0xff]
    %v208 = vld [vmem:[#allocation7 + $0x20] sm:$0xff]
    %v209 = vld [vmem:[#allocation7 + $0x28] sm:$0xff]
    %v210 = vld [vmem:[#allocation7 + $0x30] sm:$0xff]
    %v211 = vld [vmem:[#allocation7 + $0x38] sm:$0xff]
    %v212 = vld [vmem:[#allocation7 + $0x40] sm:$0xff]
    %v213 = vld [vmem:[#allocation7 + $0x48] sm:$0xff]
    %v214 = vld [vmem:[#allocation7 + $0x50] sm:$0xff]
    %v215 = vld [vmem:[#allocation7 + $0x58] sm:$0xff]
    %v216 = vld [vmem:[#allocation7 + $0x60] sm:$0xff]
    %v217 = vld [vmem:[#allocation7 + $0x68] sm:$0xff]
    %v218 = vld [vmem:[#allocation7 + $0x70] sm:$0xff]
    %v219 = vld [vmem:[#allocation7 + $0x78] sm:$0xff]
    %v220 = vld [vmem:[%s6] sm:$0x1]
    %v222 = vlaneseq
    %v223 = vshrl.u32 %v222, 7
    %v224 = vsub.s32 0, %v223
    %v225 = vrot.slane %v220, %v224
    %227 = vmatprep.subr.mxu0 0.0
    %228 = vmatpush1.msra.mxu0 %v219
    %229 = vmatprep.subr.mxu0 0.0
    %230 = vmatpush1.msra.mxu0 %v218
    %231 = vmatprep.subr.mxu0 0.0
    %232 = vmatpush1.msra.mxu0 %v217
    %233 = vmatprep.subr.mxu0 0.0
    %234 = vmatpush1.msra.mxu0 %v216
    %235 = vmatprep.subr.mxu0 0.0
    %236 = vmatpush1.msra.mxu0 %v215
    %237 = vmatprep.subr.mxu0 0.0
    %238 = vmatpush1.msra.mxu0 %v214
    %239 = vmatprep.subr.mxu0 0.0
    %240 = vmatpush1.msra.mxu0 %v213
    %241 = vmatprep.subr.mxu0 0.0
    %242 = vmatpush1.msra.mxu0 %v212
    %243 = vmatprep.subr.mxu0 0.0
    %244 = vmatpush1.msra.mxu0 %v211
    %245 = vmatprep.subr.mxu0 0.0
    %246 = vmatpush1.msra.mxu0 %v210
    %247 = vmatprep.subr.mxu0 0.0
    %248 = vmatpush1.msra.mxu0 %v209
    %249 = vmatprep.subr.mxu0 0.0
    %250 = vmatpush1.msra.mxu0 %v208
    %251 = vmatprep.subr.mxu0 0.0
    %252 = vmatpush1.msra.mxu0 %v207
    %253 = vmatprep.subr.mxu0 0.0
    %254 = vmatpush1.msra.mxu0 %v206
    %255 = vmatprep.subr.mxu0 0.0
    %256 = vmatpush1.msra.mxu0 %v205
    %257 = vmatprep.subr.mxu0 0.0
    %258 = vmatpush1.msra.mxu0 %v204
    %259 = vmatprep.subr.mxu0 0.0
    %260 = vmatpush2.msra.mxu0 0.0
    %261 = vmatprep.subr.mxu0 0.0
    %262 = vmatpush2.msra.mxu0 0.0
    %263 = vmatprep.subr.mxu0 0.0
    %264 = vmatpush2.msra.mxu0 0.0
    %265 = vmatprep.subr.mxu0 0.0
    %266 = vmatpush2.msra.mxu0 0.0
    %267 = vmatprep.subr.mxu0 0.0
    %268 = vmatpush2.msra.mxu0 0.0
    %269 = vmatprep.subr.mxu0 0.0
    %270 = vmatpush2.msra.mxu0 0.0
    %271 = vmatprep.subr.mxu0 0.0
    %272 = vmatpush2.msra.mxu0 0.0
    %273 = vmatprep.subr.mxu0 0.0
    %274 = vmatpush2.msra.mxu0 0.0
    %275 = vmatprep.subr.mxu0 0.0
    %276 = vmatpush2.msra.mxu0 0.0
    %277 = vmatprep.subr.mxu0 0.0
    %278 = vmatpush2.msra.mxu0 0.0
    %279 = vmatprep.subr.mxu0 0.0
    %280 = vmatpush2.msra.mxu0 0.0
    %281 = vmatprep.subr.mxu0 0.0
    %282 = vmatpush2.msra.mxu0 0.0
    %283 = vmatprep.subr.mxu0 0.0
    %284 = vmatpush2.msra.mxu0 0.0
    %285 = vmatprep.subr.mxu0 0.0
    %286 = vmatpush2.msra.mxu0 0.0
    %287 = vmatprep.subr.mxu0 0.0
    %288 = vmatpush2.msra.mxu0 0.0
    %289 = vmatprep.subr.mxu0 0.0
    %290 = vmatpush2.msra.mxu0 0.0
    %291 = vmatprep.mubr.f32.mxu0 0.0
    %292 = vmatmul.mubr.f32.gmra.mxu0 %v203
    %v293 = vpop.f32.mrf.mxu0
    %v294 = vadd.f32 %v225, %v293
    %v295 = vpop.f32.mrf.mxu0
    %296 = vdwg.mxu0
    %v297 = vld [vmem:[%s7] sm:$0x1]
    %v298 = vld [vmem:[%s8] sm:$0x1]
    %vm299 = vcmp.lt.s32.totalorder %v169, 32
    %v300 = vsel %vm299, 1, 0
    %v301 = vcvt.s32.f32 %v300
    %302 = vadd.xlane.f32.xlu0 %v294
    %v303 = vpop.xlane.xlu0 %302
    %v304 = vmul.f32 %v303, 0.03125
    %v305 = vsub.f32 %v294, %v304
    %v306 = vmul.f32 %v305, %v301
    %v307 = vmul.f32 %v306, %v306
    %308 = vadd.xlane.f32.xlu0 %v307
    %v309 = vpop.xlane.xlu0 %308
    %v310 = vmul.f32 %v309, 0.03125
    %v311 = vadd.f32 %v310, 1e-05
    %v312 = vrsqrt.pop %v311
    %v313 = vmul.f32 %v305, %v312
    %v315 = vlaneseq
    %v316 = vshrl.u32 %v315, 7
    %v317 = vsub.s32 0, %v316
    %v318 = vrot.slane %v297, %v317
    %v320 = vmul.f32 %v313, %v318
    %v322 = vlaneseq
    %v323 = vshrl.u32 %v322, 7
    %v324 = vsub.s32 0, %v323
    %v325 = vrot.slane %v298, %v324
    %v327 = vadd.f32 %v320, %v325
    %v328 = vmul.f32 %v327, 0.5
    %v329 = vmul.f32 %v327, 0.70710677
    %v330 = verf.f32.pop %v329
    %v331 = vadd.f32 %v330, 1.0
    %v332 = vmul.f32 %v328, %v331
    %v333 = vpack.c.bf16 %v332, %v332
    %334 = vst [vmem:[#allocation8] sm:$0xf] %v333
    // Predicated region
    $region50: #{tpu_custom_call.1} parent=1 // pred_check
      _
    $region51: #{tpu_custom_call.1} parent=1 // pred_check_branch
      %336 = sbr.rel (0) target = $region53
    $region52: #{tpu_custom_call.1} parent=1 // pred_region
      %s338 = ssub.s32 64, 64
      %339 = vsyncadd [#allocation4], %s338
      %s341 = sshll.u32 [#allocation8], 4
      %s342 = int_to_ptr.vmem [resolvable:$true] %s341
      %344 = dma.vmem_to_hbm [thread:$0]  %s342, 64, %s9, [#allocation4]
    $region53: #{tpu_custom_call.1} parent=1 // pred_fallthru
      _
    // Predicated region
    $region54: #{tpu_custom_call.1} parent=1 // pred_check
      _
    $region55: #{tpu_custom_call.1} parent=1 // pred_check_branch
      %346 = sbr.rel (0) target = $region57
    $region56: #{tpu_custom_call.1} parent=1 // pred_region
      %347 = dma.done [#allocation4], 64
    $region57: #{tpu_custom_call.1} parent=1 // pred_fallthru
      _
    %348 = vsyncpa [#allocation3], 1
    %349 = vsyncpa [#allocation6], 1
    %350 = vsyncpa [#allocation4], 1

</llo_original>
